<compile_context>
chip_gen: v7x
topology: tpu7x:2x2x1
jax: 0.10.0
libtpu: 0.0.40
codegen_flags: <defaults>
</compile_context>

<pallas_src>
import jax
import jax.numpy as jnp
from jax.experimental import pallas as pl
from jax.experimental.pallas import tpu as pltpu

_LANES = 128
_LANE_SHIFT = 7  # log2(_LANES)


def _dummy_classifier_kernel(seed_ref, out_ref):
    tile_r, lanes = out_ref.shape  # static block shape, lanes == 128

    # Global flattened element index of every (row, lane) slot in this tile.
    row_iota = jax.lax.broadcasted_iota(jnp.int32, (tile_r, lanes), 0)
    col_iota = jax.lax.broadcasted_iota(jnp.int32, (tile_r, lanes), 1)
    row0 = pl.program_id(0) * tile_r
    idx = (((row_iota + row0) << _LANE_SHIFT) | col_iota).astype(jnp.uint32)

    def _rotl(v, r):
        return (v << jnp.uint32(r)) | (v >> jnp.uint32(32 - r))

    # Counter-based ARX mixer (threefry-flavoured; add/rotate/xor only, so it
    # stays on the VPU with no 32-bit multiplies and no TPU-only primitives).
    seed = seed_ref[0].astype(jnp.uint32)
    a = idx ^ jnp.uint32(0x243F6A88)
    b = seed ^ jnp.uint32(0x85A308D3)
    for r in (13, 15, 26, 6, 17, 29, 16, 24):
        a = a + b
        b = _rotl(b, r) ^ a
    bits = a + b

    # Uniform [0, 1): build floats in [1, 2) from 23 random mantissa bits.
    mant = (bits >> jnp.uint32(9)) | jnp.uint32(0x3F800000)
    out_ref[...] = jax.lax.bitcast_convert_type(mant, jnp.float32) - jnp.float32(1.0)


def dummy_classifier_forward(x: jax.Array, predict_steps: int, seed: int = 0) -> jax.Array:
    """Equivalent of DummyClassifier.forward: uniform rand (B, predict_steps, 2)."""
    batch = x.shape[0]  # x's values are ignored, exactly like the PyTorch module
    total = batch * predict_steps * 2

    # Lane-dense slab: rows of 128 lanes, rows a multiple of 8 (>= one vreg).
    rows = -(-total // _LANES)
    rows = max(8, ((rows + 7) // 8) * 8)

    # Tile the row axis so VMEM stays bounded for any batch size and blocks
    # divide the slab exactly (no partial-block masking).
    tile_r = min(512, rows)
    num_tiles = -(-rows // tile_r)
    rows = num_tiles * tile_r

    seed_arr = jnp.array([seed], dtype=jnp.int32)

    slab = pl.pallas_call(
        _dummy_classifier_kernel,
        out_shape=jax.ShapeDtypeStruct((rows, _LANES), jnp.float32),
        grid_spec=pltpu.PrefetchScalarGridSpec(
            num_scalar_prefetch=1,          # seed lives in SMEM
            grid=(num_tiles,),
            in_specs=[],
            out_specs=pl.BlockSpec((tile_r, _LANES), lambda i, seed_ref: (i, 0)),
        ),
        compiler_params=pltpu.CompilerParams(
            dimension_semantics=("parallel",)),
        cost_estimate=pl.CostEstimate(
            flops=0, transcendentals=0,
            bytes_accessed=rows * _LANES * 4),
    )(seed_arr)

    # Cheap contiguous slice + reshape back to the PyTorch output layout.
    return slab.reshape(-1)[:total].reshape(batch, predict_steps, 2)


if __name__ == "__main__":
    # Module config implied by the forward: only predict_steps matters.
    params = {"predict_steps": 8}

    # Small deterministic input (batch=2, seq=16, features=4); its values are
    # ignored by the forward, exactly as in the PyTorch module.
    # TODO(synk): torch.rand advances global RNG state per call; here the seed
    # is passed explicitly, so repeated calls with the same seed repeat.
    key = jax.random.PRNGKey(0)
    x = jax.random.normal(key, (2, 16, 4), dtype=jnp.float32)

    out = dummy_classifier_forward(x, params["predict_steps"], seed=0)
    out = jax.block_until_ready(out)

    assert out.shape == (2, params["predict_steps"], 2), out.shape
    assert out.dtype == jnp.float32
    # Uniform [0, 1) sanity checks.
    assert bool(jnp.all(out >= 0.0)) and bool(jnp.all(out < 1.0))
    assert float(jnp.std(out)) > 0.0  # not a constant tile

    print("KERNEL_OK")
</pallas_src>

<mosaic_0001>
module attributes {stable_mosaic.version = 11 : i64} {
  func.func @_dummy_classifier_kernel(%arg0: i32, %arg1: memref<1xi32, #tpu.memory_space<smem>>, %arg2: memref<8x128xf32, #tpu.memory_space<vmem>>) attributes {dimension_semantics = [#tpu.dimension_semantics<parallel>], iteration_bounds = array<i64: 1>, scalar_prefetch = 1 : i64, scratch_operands = 0 : i64, tpu.core_type = #tpu.core_type<tc>, window_params = [{transform_indices = @transform_0, window_bounds = array<i64: 8, 128>}]} {
    %0 = tpu.iota {dimensions = array<i32: 0>} : vector<8x128xi32>
    %1 = tpu.iota {dimensions = array<i32: 1>} : vector<8x128xi32>
    %c8_i32 = arith.constant 8 : i32
    %2 = arith.muli %arg0, %c8_i32 : i32
    %3 = vector.broadcast %2 : i32 to vector<8x128xi32>
    %4 = arith.addi %0, %3 : vector<8x128xi32>
    %c7_i32 = arith.constant 7 : i32
    %5 = vector.broadcast %c7_i32 : i32 to vector<8x128xi32>
    %6 = arith.shli %4, %5 : vector<8x128xi32>
    %7 = arith.ori %6, %1 : vector<8x128xi32>
    %c0 = arith.constant 0 : index
    %8 = memref.load %arg1[%c0] : memref<1xi32, #tpu.memory_space<smem>>
    %c608135816_i32 = arith.constant 608135816 : i32
    %9 = vector.broadcast %c608135816_i32 : i32 to vector<8x128xi32>
    %10 = arith.xori %7, %9 : vector<8x128xi32>
    %c-2052912941_i32 = arith.constant -2052912941 : i32
    %11 = arith.xori %8, %c-2052912941_i32 : i32
    %12 = vector.broadcast %11 : i32 to vector<8x128xi32>
    %13 = arith.addi %10, %12 : vector<8x128xi32>
    %c13_i32 = arith.constant 13 : i32
    %14 = arith.shli %11, %c13_i32 : i32
    %c19_i32 = arith.constant 19 : i32
    %15 = arith.shrui %11, %c19_i32 : i32
    %16 = arith.ori %14, %15 : i32
    %17 = vector.broadcast %16 : i32 to vector<8x128xi32>
    %18 = arith.xori %17, %13 : vector<8x128xi32>
    %19 = arith.addi %13, %18 : vector<8x128xi32>
    %c15_i32 = arith.constant 15 : i32
    %20 = vector.broadcast %c15_i32 : i32 to vector<8x128xi32>
    %21 = arith.shli %18, %20 : vector<8x128xi32>
    %c17_i32 = arith.constant 17 : i32
    %22 = vector.broadcast %c17_i32 : i32 to vector<8x128xi32>
    %23 = arith.shrui %18, %22 : vector<8x128xi32>
    %24 = arith.ori %21, %23 : vector<8x128xi32>
    %25 = arith.xori %24, %19 : vector<8x128xi32>
    %26 = arith.addi %19, %25 : vector<8x128xi32>
    %c26_i32 = arith.constant 26 : i32
    %27 = vector.broadcast %c26_i32 : i32 to vector<8x128xi32>
    %28 = arith.shli %25, %27 : vector<8x128xi32>
    %c6_i32 = arith.constant 6 : i32
    %29 = vector.broadcast %c6_i32 : i32 to vector<8x128xi32>
    %30 = arith.shrui %25, %29 : vector<8x128xi32>
    %31 = arith.ori %28, %30 : vector<8x128xi32>
    %32 = arith.xori %31, %26 : vector<8x128xi32>
    %33 = arith.addi %26, %32 : vector<8x128xi32>
    %c6_i32_0 = arith.constant 6 : i32
    %34 = vector.broadcast %c6_i32_0 : i32 to vector<8x128xi32>
    %35 = arith.shli %32, %34 : vector<8x128xi32>
    %c26_i32_1 = arith.constant 26 : i32
    %36 = vector.broadcast %c26_i32_1 : i32 to vector<8x128xi32>
    %37 = arith.shrui %32, %36 : vector<8x128xi32>
    %38 = arith.ori %35, %37 : vector<8x128xi32>
    %39 = arith.xori %38, %33 : vector<8x128xi32>
    %40 = arith.addi %33, %39 : vector<8x128xi32>
    %c17_i32_2 = arith.constant 17 : i32
    %41 = vector.broadcast %c17_i32_2 : i32 to vector<8x128xi32>
    %42 = arith.shli %39, %41 : vector<8x128xi32>
    %c15_i32_3 = arith.constant 15 : i32
    %43 = vector.broadcast %c15_i32_3 : i32 to vector<8x128xi32>
    %44 = arith.shrui %39, %43 : vector<8x128xi32>
    %45 = arith.ori %42, %44 : vector<8x128xi32>
    %46 = arith.xori %45, %40 : vector<8x128xi32>
    %47 = arith.addi %40, %46 : vector<8x128xi32>
    %c29_i32 = arith.constant 29 : i32
    %48 = vector.broadcast %c29_i32 : i32 to vector<8x128xi32>
    %49 = arith.shli %46, %48 : vector<8x128xi32>
    %c3_i32 = arith.constant 3 : i32
    %50 = vector.broadcast %c3_i32 : i32 to vector<8x128xi32>
    %51 = arith.shrui %46, %50 : vector<8x128xi32>
    %52 = arith.ori %49, %51 : vector<8x128xi32>
    %53 = arith.xori %52, %47 : vector<8x128xi32>
    %54 = arith.addi %47, %53 : vector<8x128xi32>
    %c16_i32 = arith.constant 16 : i32
    %55 = vector.broadcast %c16_i32 : i32 to vector<8x128xi32>
    %56 = arith.shli %53, %55 : vector<8x128xi32>
    %c16_i32_4 = arith.constant 16 : i32
    %57 = vector.broadcast %c16_i32_4 : i32 to vector<8x128xi32>
    %58 = arith.shrui %53, %57 : vector<8x128xi32>
    %59 = arith.ori %56, %58 : vector<8x128xi32>
    %60 = arith.xori %59, %54 : vector<8x128xi32>
    %61 = arith.addi %54, %60 : vector<8x128xi32>
    %c24_i32 = arith.constant 24 : i32
    %62 = vector.broadcast %c24_i32 : i32 to vector<8x128xi32>
    %63 = arith.shli %60, %62 : vector<8x128xi32>
    %c8_i32_5 = arith.constant 8 : i32
    %64 = vector.broadcast %c8_i32_5 : i32 to vector<8x128xi32>
    %65 = arith.shrui %60, %64 : vector<8x128xi32>
    %66 = arith.ori %63, %65 : vector<8x128xi32>
    %67 = arith.xori %66, %61 : vector<8x128xi32>
    %68 = arith.addi %61, %67 : vector<8x128xi32>
    %c9_i32 = arith.constant 9 : i32
    %69 = vector.broadcast %c9_i32 : i32 to vector<8x128xi32>
    %70 = arith.shrui %68, %69 : vector<8x128xi32>
    %c1065353216_i32 = arith.constant 1065353216 : i32
    %71 = vector.broadcast %c1065353216_i32 : i32 to vector<8x128xi32>
    %72 = arith.ori %70, %71 : vector<8x128xi32>
    %73 = tpu.bitcast %72 : vector<8x128xi32> -> vector<8x128xf32>
    %cst = arith.constant 1.000000e+00 : f32
    %74 = vector.broadcast %cst : f32 to vector<8x128xf32>
    %75 = arith.subf %73, %74 : vector<8x128xf32>
    %c0_6 = arith.constant 0 : index
    %c0_7 = arith.constant 0 : index
    %76 = vector.load %arg2[%c0_6, %c0_7] : memref<8x128xf32, #tpu.memory_space<vmem>>, vector<8x128xf32>
    tpu.vector_store %arg2[%c0_6, %c0_7], %75 {strides = array<i32>} : memref<8x128xf32, #tpu.memory_space<vmem>>, vector<8x128xf32>,
    return
  }
  func.func @transform_0(%arg0: i32, %arg1: memref<1xi32, #tpu.memory_space<smem>>) -> (i32, i32) {
    %c0_i32 = arith.constant 0 : i32
    %c0_i32_0 = arith.constant 0 : i32
    return %arg0, %c0_i32 : i32, i32
  }
}

</mosaic_0001>

<llo_original>
// kernel: tpu_custom_call.1
$region0: #{tpu_custom_call.1}
  #allocation0 [shape = 'u32[]', space=smem, size = 0x4, offset = 0x4, fixed_abs, tag = 'smem constant byte address 0x4 - core index']
  #allocation1 [shape = 'u32[144,128]{1,0:T(1,128)}', space=vmem, size = 0x12000, scoped, tag = 'internal scratch']
  #allocation2 [shape = 's32[1]{0}', space=sflag, size = 0x4, scoped, tag = 'scoped memory for tpu_custom_call.1']
  #allocation3 [shape = 's32[1]{0:T(128)S(6)}', space=smem, size = 0x200, scoped, tag = 'prefetched SMEM operand 0']
  %s0 = inlined_call_operand.<no memory space> [shape: s32[1], index: 0, kind: input, shape index: {}]
  %s1 = inlined_call_operand.hbm [shape: f32[8,128], index: 1, kind: output, shape index: {}]
  %s2 = sld [smem:[#allocation0]]
  $region10: #{tpu_custom_call.1} parent=0
    _
  %s4 = ssub.s32 1, %s2
  %s5 = scalar_select 0, %s4, %s2
  %6 = sst [smem:[#allocation3]] %s0
  $region1: #{tpu_custom_call.1} parent=0
    #allocation4 [shape = 'u8[4096]{0}', space=vmem, size = 0x1000, scoped, tag = 'output window, operand 0, single buffered']
    #allocation5 [shape = 's32[1]{0}', space=sflag, size = 0x4, scoped, tag = 'scoped memory for tpu_custom_call.1']
    %7 = vsyncpa [#allocation5], 0
    %v8 = vlaneseq
    %v9 = vshrl.u32 %v8, 7
    %v10 = vlaneseq
    %v11 = vand.u32 %v10, 127
    %s12 = smul.u32 0, 8
    %v13 = vstv %s12
    %v14 = vadd.s32 %v9, %v13
    %v15 = vshll.u32 %v14, 7
    %v16 = vor.u32 %v15, %v11
    %s17 = sld [smem:[#allocation3]]
    %v18 = vxor.u32 %v16, 608135816
    %s19 = sxor.u32 %s17, 2242054355
    %v20 = vstv %s19
    %v21 = vadd.s32 %v18, %v20
    %s22 = sshll.u32 %s19, 13
    %s23 = sshrl.u32 %s19, 19
    %s24 = sor.u32 %s22, %s23
    %v25 = vstv %s24
    %v26 = vxor.u32 %v25, %v21
    %v27 = vadd.s32 %v21, %v26
    %v28 = vshll.u32 %v26, 15
    %v29 = vshrl.u32 %v26, 17
    %v30 = vor.u32 %v28, %v29
    %v31 = vxor.u32 %v30, %v27
    %v32 = vadd.s32 %v27, %v31
    %v33 = vshll.u32 %v31, 26
    %v34 = vshrl.u32 %v31, 6
    %v35 = vor.u32 %v33, %v34
    %v36 = vxor.u32 %v35, %v32
    %v37 = vadd.s32 %v32, %v36
    %v38 = vshll.u32 %v36, 6
    %v39 = vshrl.u32 %v36, 26
    %v40 = vor.u32 %v38, %v39
    %v41 = vxor.u32 %v40, %v37
    %v42 = vadd.s32 %v37, %v41
    %v43 = vshll.u32 %v41, 17
    %v44 = vshrl.u32 %v41, 15
    %v45 = vor.u32 %v43, %v44
    %v46 = vxor.u32 %v45, %v42
    %v47 = vadd.s32 %v42, %v46
    %v48 = vshll.u32 %v46, 29
    %v49 = vshrl.u32 %v46, 3
    %v50 = vor.u32 %v48, %v49
    %v51 = vxor.u32 %v50, %v47
    %v52 = vadd.s32 %v47, %v51
    %v53 = vshll.u32 %v51, 16
    %v54 = vshrl.u32 %v51, 16
    %v55 = vor.u32 %v53, %v54
    %v56 = vxor.u32 %v55, %v52
    %v57 = vadd.s32 %v52, %v56
    %v58 = vshll.u32 %v56, 24
    %v59 = vshrl.u32 %v56, 8
    %v60 = vor.u32 %v58, %v59
    %v61 = vxor.u32 %v60, %v57
    %v62 = vadd.s32 %v57, %v61
    %v63 = vshrl.u32 %v62, 9
    %v64 = vor.u32 %v63, 1065353216
    %v66 = vsub.f32 %v64, 1.0
    %67 = vst [vmem:[#allocation4] sm:$0xff] %v66
    // Predicated region
    $region2: #{tpu_custom_call.1} parent=1 // pred_check
      _
    $region3: #{tpu_custom_call.1} parent=1 // pred_check_branch
      %69 = sbr.rel (0) target = $region5
    $region4: #{tpu_custom_call.1} parent=1 // pred_region
      %s71 = ssub.s32 128, 128
      %72 = vsyncadd [#allocation5], %s71
      %s74 = sshll.u32 [#allocation4], 4
      %s75 = int_to_ptr.vmem [resolvable:$true] %s74
      %77 = dma.vmem_to_hbm [thread:$0]  %s75, 128, %s1, [#allocation5]
    $region5: #{tpu_custom_call.1} parent=1 // pred_fallthru
      _
    // Predicated region
    $region6: #{tpu_custom_call.1} parent=1 // pred_check
      _
    $region7: #{tpu_custom_call.1} parent=1 // pred_check_branch
      %79 = sbr.rel (0) target = $region9
    $region8: #{tpu_custom_call.1} parent=1 // pred_region
      %80 = dma.done [#allocation5], 128
    $region9: #{tpu_custom_call.1} parent=1 // pred_fallthru
      _
    %81 = vsyncpa [#allocation5], 1

</llo_original>
